<compile_context>
chip_gen: v5e
topology: v5e:2x2
jax: 0.10.0
libtpu: 0.0.40
codegen_flags: <defaults>
</compile_context>

<pallas_src>
import jax
import jax.numpy as jnp
import numpy as np
from jax.experimental import pallas as pl
from jax.experimental.pallas import tpu as pltpu


def _locked_dropout_kernel(x_ref, m_ref, o_ref):
    # Pure broadcast multiply.  The mask block has a size-1 time axis
    # (batch_first=True) or a size-1 leading block (batch_first=False), so
    # jnp broadcasting "locks" the mask along time inside every tile.
    o_ref[...] = x_ref[...] * m_ref[...]


def locked_dropout(x, seed, dropout=0.5, batch_first=True, training=True):
    """Functional LockedDropout.

    `fixed=True` in the PyTorch module (reuse the previous mask) corresponds
    to calling this function again with the same `seed`.
    """
    if (not training) or dropout == 0.0:
        return x

    keep_prob = 1.0 - float(dropout)
    itemsize = jnp.dtype(x.dtype).itemsize
    key = jax.random.PRNGKey(seed)

    # ~2 MiB per x block -> (input + output) * double buffering ~= 8 MiB of
    # VMEM, safe against the default scoped-VMEM limit on v5e/v6e/v7x.
    target_bytes = 2 << 20

    if batch_first:
        B, T, D = x.shape
        mask = jax.random.bernoulli(key, p=keep_prob, shape=(B, 1, D))
        mask = mask.astype(x.dtype) * jnp.asarray(1.0 / keep_prob, x.dtype)

        # Time tile: multiple of 8 sublanes (or full T), capped by VMEM budget.
        if T <= 8 or T * D * itemsize <= target_bytes:
            tT = T
        else:
            tT = max(8, min(T, (target_bytes // (D * itemsize)) // 8 * 8))
        # If T is short, widen over batch so each grid step moves a big slab.
        bB = max(1, min(B, target_bytes // (tT * D * itemsize)))

        grid = (pl.cdiv(B, bB), pl.cdiv(T, tT))
        in_specs = [
            pl.BlockSpec((bB, tT, D), lambda b, t: (b, t, 0)),   # x tile
            pl.BlockSpec((bB, 1, D), lambda b, t: (b, 0, 0)),    # mask tile
        ]
        out_spec = pl.BlockSpec((bB, tT, D), lambda b, t: (b, t, 0))
        dim_sem = ("parallel", "parallel")
    else:
        # Native (T, B, D) handling: block over the leading time axis,
        # reuse the same (1, B, D) mask block in every grid step.
        T, B, D = x.shape
        mask = jax.random.bernoulli(key, p=keep_prob, shape=(1, B, D))
        mask = mask.astype(x.dtype) * jnp.asarray(1.0 / keep_prob, x.dtype)

        tT = max(1, min(T, target_bytes // (B * D * itemsize)))
        grid = (pl.cdiv(T, tT),)
        in_specs = [
            pl.BlockSpec((tT, B, D), lambda t: (t, 0, 0)),       # x tile
            pl.BlockSpec((1, B, D), lambda t: (0, 0, 0)),        # mask tile
        ]
        out_spec = pl.BlockSpec((tT, B, D), lambda t: (t, 0, 0))
        dim_sem = ("parallel",)

    return pl.pallas_call(
        _locked_dropout_kernel,
        out_shape=jax.ShapeDtypeStruct(x.shape, x.dtype),
        grid=grid,
        in_specs=in_specs,
        out_specs=out_spec,
        compiler_params=pltpu.CompilerParams(dimension_semantics=dim_sem),
    )(x, mask)


# TODO(synk): the module's stateful `self.mask` reuse (`fixed=True`) across
# calls has no clean stateless equivalent; it is modeled as "same seed ->
# same mask".

if __name__ == "__main__":
    key = jax.random.PRNGKey(0)
    B, T, D = 2, 8, 128
    dropout = 0.5
    scale = 1.0 / (1.0 - dropout)

    # Keep x away from zero so the mask can be recovered exactly for checking.
    x = jax.random.uniform(key, (B, T, D), jnp.float32, minval=0.5, maxval=1.5)

    out = locked_dropout(x, seed=1234, dropout=dropout,
                         batch_first=True, training=True)
    out = jax.block_until_ready(out)

    xn = np.asarray(x)
    on = np.asarray(out)

    # 1) mask must be constant ("locked") along the time axis
    m0 = on[:, :1, :] / xn[:, :1, :]          # mask recovered from timestep 0
    assert np.allclose(on, xn * m0, rtol=1e-5, atol=1e-5), "mask not locked in time"

    # 2) mask values must be either 0 or 1/(1-p)
    assert np.all((np.abs(m0) < 1e-5) | (np.abs(m0 - scale) < 1e-4)), "bad mask values"

    # 3) eval mode / dropout==0 is identity (matches the PyTorch module)
    out_eval = jax.block_until_ready(
        locked_dropout(x, seed=1234, dropout=dropout, training=False))
    assert np.allclose(np.asarray(out_eval), xn)

    # 4) batch_first=False path: (T, B, D), mask locked along axis 0 (time)
    x_tbd = jnp.transpose(x, (1, 0, 2))
    out_tbd = jax.block_until_ready(
        locked_dropout(x_tbd, seed=7, dropout=dropout,
                       batch_first=False, training=True))
    xt = np.asarray(x_tbd)
    ot = np.asarray(out_tbd)
    assert ot.shape == xt.shape
    mt = ot[:1, :, :] / xt[:1, :, :]
    assert np.allclose(ot, xt * mt, rtol=1e-5, atol=1e-5), "mask not locked (T,B,D)"
    assert np.all((np.abs(mt) < 1e-5) | (np.abs(mt - scale) < 1e-4)), "bad mask (T,B,D)"

    print("KERNEL_OK")
</pallas_src>

<mosaic_0001>
module attributes {stable_mosaic.version = 11 : i64} {
  func.func @_locked_dropout_kernel(%arg0: i32, %arg1: i32, %arg2: memref<2x8x128xf32, #tpu.memory_space<vmem>>, %arg3: memref<2x1x128xf32, #tpu.memory_space<vmem>>, %arg4: memref<2x8x128xf32, #tpu.memory_space<vmem>>) attributes {dimension_semantics = [#tpu.dimension_semantics<parallel>, #tpu.dimension_semantics<parallel>], iteration_bounds = array<i64: 1, 1>, scalar_prefetch = 0 : i64, scratch_operands = 0 : i64, tpu.core_type = #tpu.core_type<tc>, window_params = [{transform_indices = @transform_0, window_bounds = array<i64: 2, 8, 128>}, {transform_indices = @transform_1, window_bounds = array<i64: 2, 1, 128>}, {transform_indices = @transform_2, window_bounds = array<i64: 2, 8, 128>}]} {
    %c0 = arith.constant 0 : index
    %c0_0 = arith.constant 0 : index
    %c0_1 = arith.constant 0 : index
    %0 = vector.load %arg2[%c0, %c0_0, %c0_1] : memref<2x8x128xf32, #tpu.memory_space<vmem>>, vector<2x8x128xf32>
    %c0_2 = arith.constant 0 : index
    %c0_3 = arith.constant 0 : index
    %c0_4 = arith.constant 0 : index
    %1 = vector.load %arg3[%c0_2, %c0_3, %c0_4] : memref<2x1x128xf32, #tpu.memory_space<vmem>>, vector<2x1x128xf32>
    %2 = vector.broadcast %1 : vector<2x1x128xf32> to vector<2x8x128xf32>
    %3 = arith.mulf %0, %2 : vector<2x8x128xf32>
    %c0_5 = arith.constant 0 : index
    %c0_6 = arith.constant 0 : index
    %c0_7 = arith.constant 0 : index
    %4 = vector.load %arg4[%c0_5, %c0_6, %c0_7] : memref<2x8x128xf32, #tpu.memory_space<vmem>>, vector<2x8x128xf32>
    tpu.vector_store %arg4[%c0_5, %c0_6, %c0_7], %3 {strides = array<i32>} : memref<2x8x128xf32, #tpu.memory_space<vmem>>, vector<2x8x128xf32>,
    return
  }
  func.func @transform_0(%arg0: i32, %arg1: i32) -> (i32, i32, i32) {
    %c0_i32 = arith.constant 0 : i32
    %c0_i32_0 = arith.constant 0 : i32
    return %arg0, %arg1, %c0_i32 : i32, i32, i32
  }
  func.func @transform_1(%arg0: i32, %arg1: i32) -> (i32, i32, i32) {
    %c0_i32 = arith.constant 0 : i32
    %c0_i32_0 = arith.constant 0 : i32
    %c0_i32_1 = arith.constant 0 : i32
    return %arg0, %c0_i32, %c0_i32_0 : i32, i32, i32
  }
  func.func @transform_2(%arg0: i32, %arg1: i32) -> (i32, i32, i32) {
    %c0_i32 = arith.constant 0 : i32
    %c0_i32_0 = arith.constant 0 : i32
    return %arg0, %arg1, %c0_i32 : i32, i32, i32
  }
}

</mosaic_0001>

<llo_original>
// kernel: tpu_custom_call.1
$region0: #{tpu_custom_call.1}
  #allocation0 [shape = 'u32[]', space=smem, size = 0x4, offset = 0x4, fixed_abs, tag = 'smem constant byte address 0x4 - core index']
  #allocation1 [shape = 'u32[72,128]{1,0:T(1,128)}', space=vmem, size = 0x9000, scoped, tag = 'internal scratch']
  %s0 = inlined_call_operand.hbm [shape: f32[2,8,128], index: 0, kind: input, shape index: {}]
  %s1 = inlined_call_operand.hbm [shape: f32[2,1,128], index: 1, kind: input, shape index: {}]
  %s2 = inlined_call_operand.hbm [shape: f32[2,8,128], index: 2, kind: output, shape index: {}]
  %s3 = sld [smem:[#allocation0]]
  $region26: #{tpu_custom_call.1} parent=0
    _
  %s5 = ssub.s32 1, %s3
  %s6 = scalar_select 0, %s5, %s3
  $region1: #{tpu_custom_call.1} parent=0
    #allocation2 [shape = 'u8[8192]{0}', space=vmem, size = 0x2000, scoped, tag = 'input window, operand 0, single buffered']
    #allocation3 [shape = 's32[1]{0}', space=sflag, size = 0x4, scoped, tag = 'scoped memory for tpu_custom_call.1']
    #allocation4 [shape = 's32[1]{0}', space=sflag, size = 0x4, scoped, tag = 'scoped memory for tpu_custom_call.1']
    #allocation5 [shape = 'u8[1024]{0}', space=vmem, size = 0x400, scoped, tag = 'input window, operand 1, single buffered']
    #allocation6 [shape = 's32[1]{0}', space=sflag, size = 0x4, scoped, tag = 'scoped memory for tpu_custom_call.1']
    #allocation7 [shape = 'u8[8192]{0}', space=vmem, size = 0x2000, scoped, tag = 'output window, operand 0, single buffered']
    %7 = vsyncpa [#allocation3], 0
    %8 = vsyncpa [#allocation6], 0
    %9 = vsyncpa [#allocation4], 0
    // Predicated region
    $region2: #{tpu_custom_call.1} parent=1 // pred_check
      _
    $region3: #{tpu_custom_call.1} parent=1 // pred_check_branch
      %11 = sbr.rel (0) target = $region5
    $region4: #{tpu_custom_call.1} parent=1 // pred_region
      %13 = vsyncadd [#allocation3], 0
      %s14 = sshll.u32 %s0, 4
      %s15 = int_to_ptr.hbm [resolvable:$true] %s14
      %s16 = sshll.u32 [#allocation2], 4
      %s17 = int_to_ptr.vmem [resolvable:$true] %s16
      %22 = dma.hbm_to_vmem [thread:$0]  %s15, 256, %s17, [#allocation3], 128, 128, 8
    $region5: #{tpu_custom_call.1} parent=1 // pred_fallthru
      _
    // Predicated region
    $region6: #{tpu_custom_call.1} parent=1 // pred_check
      _
    $region7: #{tpu_custom_call.1} parent=1 // pred_check_branch
      %24 = sbr.rel (0) target = $region9
    $region8: #{tpu_custom_call.1} parent=1 // pred_region
      %26 = vsyncadd [#allocation6], 0
      %s27 = sshll.u32 %s1, 4
      %s28 = int_to_ptr.hbm [resolvable:$true] %s27
      %s29 = sshll.u32 [#allocation5], 4
      %s30 = int_to_ptr.vmem [resolvable:$true] %s29
      %35 = dma.hbm_to_vmem [thread:$0]  %s28, 32, %s30, [#allocation6], 16, 16, 1
    $region9: #{tpu_custom_call.1} parent=1 // pred_fallthru
      _
    // Predicated region
    $region10: #{tpu_custom_call.1} parent=1 // pred_check
      _
    $region11: #{tpu_custom_call.1} parent=1 // pred_check_branch
      %37 = sbr.rel (0) target = $region13
    $region12: #{tpu_custom_call.1} parent=1 // pred_region
      %39 = dma.done [#allocation3], 256
    $region13: #{tpu_custom_call.1} parent=1 // pred_fallthru
      _
    // Predicated region
    $region14: #{tpu_custom_call.1} parent=1 // pred_check
      _
    $region15: #{tpu_custom_call.1} parent=1 // pred_check_branch
      %41 = sbr.rel (0) target = $region17
    $region16: #{tpu_custom_call.1} parent=1 // pred_region
      %43 = dma.done [#allocation6], 32
    $region17: #{tpu_custom_call.1} parent=1 // pred_fallthru
      _
    %v44 = vld [vmem:[#allocation2] sm:$0xff]
    %v45 = vld [vmem:[#allocation2 + $0x8] sm:$0xff]
    %v46 = vld [vmem:[#allocation5] sm:$0x1]
    %v47 = vld [vmem:[#allocation5 + $0x1] sm:$0x1]
    %v50 = vperm.slane %v46, 0
    %v51 = vperm.slane %v47, 0
    %v54 = vmul.f32 %v44, %v50
    %v55 = vmul.f32 %v45, %v51
    %56 = vst [vmem:[#allocation7] sm:$0xff] %v54
    %57 = vst [vmem:[#allocation7 + $0x8] sm:$0xff] %v55
    // Predicated region
    $region18: #{tpu_custom_call.1} parent=1 // pred_check
      _
    $region19: #{tpu_custom_call.1} parent=1 // pred_check_branch
      %59 = sbr.rel (0) target = $region21
    $region20: #{tpu_custom_call.1} parent=1 // pred_region
      %61 = vsyncadd [#allocation4], 0
      %s62 = sshll.u32 [#allocation7], 4
      %s63 = int_to_ptr.vmem [resolvable:$true] %s62
      %s64 = sshll.u32 %s2, 4
      %s65 = int_to_ptr.hbm [resolvable:$true] %s64
      %70 = dma.vmem_to_hbm [thread:$0]  %s63, 256, %s65, [#allocation4], 128, 128, 8
    $region21: #{tpu_custom_call.1} parent=1 // pred_fallthru
      _
    // Predicated region
    $region22: #{tpu_custom_call.1} parent=1 // pred_check
      _
    $region23: #{tpu_custom_call.1} parent=1 // pred_check_branch
      %72 = sbr.rel (0) target = $region25
    $region24: #{tpu_custom_call.1} parent=1 // pred_region
      %74 = dma.done [#allocation4], 256
    $region25: #{tpu_custom_call.1} parent=1 // pred_fallthru
      _
    %75 = vsyncpa [#allocation3], 1
    %76 = vsyncpa [#allocation6], 1
    %77 = vsyncpa [#allocation4], 1

</llo_original>
